<compile_context>
chip_gen: v7x
topology: tpu7x:2x2x1
jax: 0.10.0
libtpu: 0.0.40
codegen_flags: <defaults>
</compile_context>

<pallas_src>
import functools

import jax
import jax.numpy as jnp
from jax.experimental import pallas as pl
from jax.experimental.pallas import tpu as pltpu


def _round_up(x, m):
    return (x + m - 1) // m * m


def cheby_kan_kernel(x_ref, w_ref, w0_ref, o_ref, slab_ref, *, degree, in_p):
    """x_ref: (tb, in_p) | w_ref: (degree*in_p, out_p) bf16 | w0_ref: (1, out_p) f32
    slab_ref: (tb, degree*in_p) bf16 VMEM scratch holding T_1..T_degree."""
    # tanh on the EUP in f32.  (bf16 tanh on v6e/v7x roughly doubles EUP
    # throughput but perturbs T_d by ~O(d^2 * 4e-3) near |t|~1 — validate
    # against the acos reference before switching.)
    t = jnp.tanh(x_ref[...].astype(jnp.float32))

    # Chebyshev recurrence T_1..T_degree (static unroll).  Each feature is cast
    # to bf16 as it is produced and written into its lane-aligned 128-wide slot
    # of the VMEM scratch slab, so only t / t_prev / t_cur stay live in vregs.
    slab_ref[:, pl.ds(0, in_p)] = t.astype(slab_ref.dtype)              # T_1
    if degree >= 2:
        t_prev, t_cur = t, 2.0 * t * t - 1.0                            # T_2, no ones
        slab_ref[:, pl.ds(in_p, in_p)] = t_cur.astype(slab_ref.dtype)
        for d in range(3, degree + 1):
            t_prev, t_cur = t_cur, 2.0 * t * t_cur - t_prev
            slab_ref[:, pl.ds((d - 1) * in_p, in_p)] = t_cur.astype(slab_ref.dtype)

    # One fused MXU matmul (K = degree*in_p, a multiple of 128), f32
    # accumulation, plus the degree-0 column-sum bias row (VPU broadcast add).
    acc = jnp.dot(slab_ref[...], w_ref[...], preferred_element_type=jnp.float32)
    o_ref[...] = (acc + w0_ref[...]).astype(o_ref.dtype)


def prepare_cheby_kan_weights(cheby_coeffs, *, lane_pad=128,
                              matmul_dtype=jnp.bfloat16):
    """One-time parameter layout (do this at init, NOT per forward call).

    cheby_coeffs: (in_features, out_features, degree+1) f32 (PyTorch layout).
    Returns:
      w_fused: (degree*in_p, out_p) matmul_dtype — degrees 1..D stacked along
               the contraction axis; in/out padded to multiples of `lane_pad`.
               Padded in positions get ALL-ZERO rows in every degree slot.
      w0_row : (1, out_p) f32 — column-sum of the degree-0 coefficients.

    On v7x, matmul_dtype=jnp.float8_e4m3fn halves resident weight VMEM and
    raises MXU throughput; keep bf16 on v5e/v6e (no fp8 MXU) and re-validate
    accuracy before adopting fp8.
    """
    in_features, out_features, dp1 = cheby_coeffs.shape
    degree = dp1 - 1
    assert degree >= 1, "degree must be >= 1"
    in_p = _round_up(in_features, lane_pad)
    out_p = _round_up(out_features, lane_pad)

    w0 = jnp.sum(cheby_coeffs[:, :, 0], axis=0)                          # (out,)
    w0_row = jnp.pad(w0, (0, out_p - out_features)).reshape(1, out_p)
    w0_row = w0_row.astype(jnp.float32)

    # (D, in, out) -> zero-pad BOTH in and out per degree slot -> fuse along K.
    # The zero rows at padded in positions are required for correctness: the
    # padded x columns produce T_even(0) = +/-1 in the kernel.
    w_rest = jnp.transpose(cheby_coeffs[:, :, 1:], (2, 0, 1))            # (D, in, out)
    w_rest = jnp.pad(w_rest, ((0, 0),
                              (0, in_p - in_features),
                              (0, out_p - out_features)))                # (D, in_p, out_p)
    w_fused = w_rest.reshape(degree * in_p, out_p).astype(matmul_dtype)
    return w_fused, w0_row


def _default_vmem_limit_bytes():
    # Generation-aware budget: ~85% of physical VMEM (v5e/v6e: 128 MiB,
    # v7x: 64 MiB per TensorCore), conservative fallback if the query fails.
    try:
        cap = int(pltpu.get_tpu_info().vmem_capacity_bytes)
        return max(32 * 1024 * 1024, int(cap * 0.85))
    except Exception:
        return 48 * 1024 * 1024


def cheby_kan_forward(x, w_fused, w0_row, *, in_features, out_features, degree,
                      tb=None, out_dtype=None, vmem_limit_bytes=None):
    """x: (..., in_features) -> (B, out_features), B = prod(leading dims)."""
    assert degree >= 1
    out_p = w0_row.shape[1]
    in_p = w_fused.shape[0] // degree
    assert w_fused.shape == (degree * in_p, out_p)
    # Emitting bf16 output (out_dtype=jnp.bfloat16) halves HBM writes in the
    # memory-bound small-feature regime if the consumer tolerates it.
    out_dtype = x.dtype if out_dtype is None else out_dtype
    if vmem_limit_bytes is None:
        vmem_limit_bytes = _default_vmem_limit_bytes()

    x2d = x.reshape(-1, in_features)
    B = x2d.shape[0]
    # Lane-align the contraction: zero-pad in_features up to in_p.  The
    # matching weight rows are zero, so the padded columns contribute nothing.
    if in_p != in_features:
        x2d = jnp.pad(x2d, ((0, 0), (0, in_p - in_features)))

    w_bytes = w_fused.size * w_fused.dtype.itemsize
    # Single-buffer the constant-index weight/bias slabs once double-buffering
    # would cost meaningful VMEM (critical under v7x's 64 MiB/TC).
    single_buffer_weights = w_bytes > 4 * 1024 * 1024
    w_buffers = 1 if single_buffer_weights else 2

    if tb is None:
        # VMEM bytes held per batch row: double-buffered x tile, double-
        # buffered output tile, single-buffered bf16 feature slab.
        per_row = (2 * in_p * x2d.dtype.itemsize
                   + 2 * out_p * jnp.dtype(out_dtype).itemsize
                   + degree * in_p * 2)
        fixed = w_buffers * w_bytes + 2 * w0_row.size * 4
        avail = max(vmem_limit_bytes - fixed, per_row * 16)
        fit = max(int(avail // per_row), 16)
        # Small feature widths are step-overhead / memory bound -> bigger tiles;
        # wide layers stay at <=512 so the resident weights keep their budget.
        cap = 2048 if per_row <= 8 * 1024 else 512
        tb = min(cap, fit, _round_up(B, 16))
        tb = (tb // 256) * 256 if tb >= 512 else max(16, (tb // 16) * 16)
    tb = max(8, (tb // 8) * 8)

    Bp = _round_up(B, tb)
    if Bp != B:
        x2d = jnp.pad(x2d, ((0, Bp - B), (0, 0)))   # padded rows sliced off below
    grid = (Bp // tb,)

    if single_buffer_weights:
        w_spec = pl.BlockSpec((degree * in_p, out_p), lambda i: (0, 0),
                              pipeline_mode=pl.Buffered(1))
        w0_spec = pl.BlockSpec((1, out_p), lambda i: (0, 0),
                               pipeline_mode=pl.Buffered(1))
    else:
        w_spec = pl.BlockSpec((degree * in_p, out_p), lambda i: (0, 0))
        w0_spec = pl.BlockSpec((1, out_p), lambda i: (0, 0))

    kernel = functools.partial(cheby_kan_kernel, degree=degree, in_p=in_p)

    # TODO(synk): for very wide layers (bf16 w_fused > ~20 MiB on v7x) add a
    # K-split "arbitrary" grid axis with an f32 accumulator scratch + pl.when
    # init/finalize instead of keeping the whole fused weight slab resident.
    out = pl.pallas_call(
        kernel,
        out_shape=jax.ShapeDtypeStruct((Bp, out_p), out_dtype),
        grid_spec=pltpu.PrefetchScalarGridSpec(
            num_scalar_prefetch=0,
            grid=grid,
            in_specs=[
                pl.BlockSpec((tb, in_p), lambda i: (i, 0)),
                w_spec,
                w0_spec,
            ],
            out_specs=pl.BlockSpec((tb, out_p), lambda i: (i, 0)),
            scratch_shapes=[pltpu.VMEM((tb, degree * in_p), jnp.bfloat16)],
        ),
        compiler_params=pltpu.CompilerParams(
            dimension_semantics=("parallel",),
            vmem_limit_bytes=vmem_limit_bytes,
        ),
    )(x2d, w_fused, w0_row)

    return out[:B, :out_features]


def cheby_kan_reference(x, cheby_coeffs):
    """Pure-JAX mirror of the PyTorch forward (acos/cos path, f32)."""
    in_features, out_features, dp1 = cheby_coeffs.shape
    t = jnp.clip(jnp.tanh(x.reshape(-1, in_features)), -1.0 + 1e-6, 1.0 - 1e-6)
    theta = jnp.arccos(t)                                      # (B, in)
    d = jnp.arange(dp1, dtype=t.dtype)
    feats = jnp.cos(theta[:, :, None] * d[None, None, :])      # (B, in, D+1)
    return jnp.einsum("bid,iod->bo", feats, cheby_coeffs)


if __name__ == "__main__":
    in_features = 32
    out_features = 16
    degree = 3
    batch = 8

    key = jax.random.PRNGKey(0)
    k_x, k_w = jax.random.split(key)

    # Deterministic init mirroring nn.init.normal_(std=1/(in*(degree+1))).
    std = 1.0 / (in_features * (degree + 1))
    cheby_coeffs = (jax.random.normal(
        k_w, (in_features, out_features, degree + 1), dtype=jnp.float32) * std)
    x = jax.random.normal(k_x, (batch, in_features), dtype=jnp.float32)

    # One-time weight layout (analog of doing it at nn.Module init time).
    w_fused, w0_row = prepare_cheby_kan_weights(cheby_coeffs)

    y = cheby_kan_forward(x, w_fused, w0_row,
                          in_features=in_features,
                          out_features=out_features,
                          degree=degree)
    y = jax.block_until_ready(y)

    y_ref = cheby_kan_reference(x, cheby_coeffs)
    assert y.shape == (batch, out_features)
    # bf16 matmul operands with f32 accumulation -> tolerance loosened vs f32.
    assert jnp.allclose(y, y_ref, atol=5e-3, rtol=5e-2), "mismatch vs reference"

    print("KERNEL_OK")
</pallas_src>

<mosaic_0001>
module attributes {stable_mosaic.version = 11 : i64} {
  func.func @cheby_kan_kernel(%arg0: i32, %arg1: memref<16x128xf32, #tpu.memory_space<vmem>>, %arg2: memref<384x128xbf16, #tpu.memory_space<vmem>>, %arg3: memref<1x128xf32, #tpu.memory_space<vmem>>, %arg4: memref<16x128xf32, #tpu.memory_space<vmem>>, %arg5: memref<16x384xbf16, #tpu.memory_space<vmem>>) attributes {dimension_semantics = [#tpu.dimension_semantics<parallel>], iteration_bounds = array<i64: 1>, scalar_prefetch = 0 : i64, scratch_operands = 1 : i64, tpu.core_type = #tpu.core_type<tc>, window_params = [{transform_indices = @transform_0, window_bounds = array<i64: 16, 128>}, {pipeline_mode = #tpu.pipeline_mode<synchronous>, transform_indices = @transform_1, window_bounds = array<i64: 384, 128>}, {pipeline_mode = #tpu.pipeline_mode<synchronous>, transform_indices = @transform_2, window_bounds = array<i64: 1, 128>}, {transform_indices = @transform_3, window_bounds = array<i64: 16, 128>}]} {
    %c0 = arith.constant 0 : index
    %c0_0 = arith.constant 0 : index
    %0 = vector.load %arg1[%c0, %c0_0] : memref<16x128xf32, #tpu.memory_space<vmem>>, vector<16x128xf32>
    %1 = math.tanh %0 : vector<16x128xf32>
    %2 = arith.truncf %1 : vector<16x128xf32> to vector<16x128xbf16>
    %c0_1 = arith.constant 0 : index
    %c0_2 = arith.constant 0 : index
    %3 = vector.load %arg5[%c0_1, %c0_2] : memref<16x384xbf16, #tpu.memory_space<vmem>>, vector<16x128xbf16>
    tpu.vector_store %arg5[%c0_1, %c0_2], %2 {strides = array<i32>} : memref<16x384xbf16, #tpu.memory_space<vmem>>, vector<16x128xbf16>,
    %cst = arith.constant 2.000000e+00 : f32
    %4 = vector.broadcast %cst : f32 to vector<16x128xf32>
    %5 = arith.mulf %4, %1 : vector<16x128xf32>
    %6 = arith.mulf %5, %1 : vector<16x128xf32>
    %cst_3 = arith.constant 1.000000e+00 : f32
    %7 = vector.broadcast %cst_3 : f32 to vector<16x128xf32>
    %8 = arith.subf %6, %7 : vector<16x128xf32>
    %9 = arith.truncf %8 : vector<16x128xf32> to vector<16x128xbf16>
    %c0_4 = arith.constant 0 : index
    %c128 = arith.constant 128 : index
    %10 = vector.load %arg5[%c0_4, %c128] : memref<16x384xbf16, #tpu.memory_space<vmem>>, vector<16x128xbf16>
    tpu.vector_store %arg5[%c0_4, %c128], %9 {strides = array<i32>} : memref<16x384xbf16, #tpu.memory_space<vmem>>, vector<16x128xbf16>,
    %cst_5 = arith.constant 2.000000e+00 : f32
    %11 = vector.broadcast %cst_5 : f32 to vector<16x128xf32>
    %12 = arith.mulf %11, %1 : vector<16x128xf32>
    %13 = arith.mulf %12, %8 : vector<16x128xf32>
    %14 = arith.subf %13, %1 : vector<16x128xf32>
    %15 = arith.truncf %14 : vector<16x128xf32> to vector<16x128xbf16>
    %c0_6 = arith.constant 0 : index
    %c256 = arith.constant 256 : index
    %16 = vector.load %arg5[%c0_6, %c256] : memref<16x384xbf16, #tpu.memory_space<vmem>>, vector<16x128xbf16>
    tpu.vector_store %arg5[%c0_6, %c256], %15 {strides = array<i32>} : memref<16x384xbf16, #tpu.memory_space<vmem>>, vector<16x128xbf16>,
    %c0_7 = arith.constant 0 : index
    %c0_8 = arith.constant 0 : index
    %17 = vector.load %arg5[%c0_7, %c0_8] : memref<16x384xbf16, #tpu.memory_space<vmem>>, vector<16x384xbf16>
    %c0_9 = arith.constant 0 : index
    %c0_10 = arith.constant 0 : index
    %18 = vector.load %arg2[%c0_9, %c0_10] : memref<384x128xbf16, #tpu.memory_space<vmem>>, vector<384x128xbf16>
    %cst_11 = arith.constant dense<0.000000e+00> : vector<16x128xf32>
    %19 = tpu.matmul %17, %18, %cst_11 {dimension_numbers = #tpu.dot_dimension_numbers<[1], [0], [0], [1], [0, 0, 1, 1], [], []>} : vector<16x384xbf16>, vector<384x128xbf16>, vector<16x128xf32> -> vector<16x128xf32>
    %c0_12 = arith.constant 0 : index
    %c0_13 = arith.constant 0 : index
    %20 = vector.load %arg3[%c0_12, %c0_13] : memref<1x128xf32, #tpu.memory_space<vmem>>, vector<1x128xf32>
    %21 = vector.broadcast %20 : vector<1x128xf32> to vector<16x128xf32>
    %22 = arith.addf %19, %21 : vector<16x128xf32>
    %c0_14 = arith.constant 0 : index
    %c0_15 = arith.constant 0 : index
    %23 = vector.load %arg4[%c0_14, %c0_15] : memref<16x128xf32, #tpu.memory_space<vmem>>, vector<16x128xf32>
    tpu.vector_store %arg4[%c0_14, %c0_15], %22 {strides = array<i32>} : memref<16x128xf32, #tpu.memory_space<vmem>>, vector<16x128xf32>,
    return
  }
  func.func @transform_0(%arg0: i32) -> (i32, i32) {
    %c0_i32 = arith.constant 0 : i32
    %c0_i32_0 = arith.constant 0 : i32
    return %arg0, %c0_i32 : i32, i32
  }
  func.func @transform_1(%arg0: i32) -> (i32, i32) {
    %c0_i32 = arith.constant 0 : i32
    %c0_i32_0 = arith.constant 0 : i32
    %c0_i32_1 = arith.constant 0 : i32
    return %c0_i32, %c0_i32_0 : i32, i32
  }
  func.func @transform_2(%arg0: i32) -> (i32, i32) {
    %c0_i32 = arith.constant 0 : i32
    %c0_i32_0 = arith.constant 0 : i32
    %c0_i32_1 = arith.constant 0 : i32
    return %c0_i32, %c0_i32_0 : i32, i32
  }
  func.func @transform_3(%arg0: i32) -> (i32, i32) {
    %c0_i32 = arith.constant 0 : i32
    %c0_i32_0 = arith.constant 0 : i32
    return %arg0, %c0_i32 : i32, i32
  }
}

</mosaic_0001>

<llo_original>
// kernel: tpu_custom_call.1
$region0: #{tpu_custom_call.1}
  #allocation0 [shape = 'u32[]', space=smem, size = 0x4, offset = 0x4, fixed_abs, tag = 'smem constant byte address 0x4 - core index']
  #allocation1 [shape = 'u32[144,128]{1,0:T(1,128)}', space=vmem, size = 0x12000, scoped, tag = 'internal scratch']
  #allocation2 [shape = 'bf16[16,384]{1,0:T(16,128)(2,1)}', space=vmem, size = 0x3000, scoped, tag = 'scratch operand']
  %s0 = inlined_call_operand.hbm [shape: f32[16,128], index: 0, kind: input, shape index: {}]
  %s1 = inlined_call_operand.hbm [shape: bf16[384,128], index: 1, kind: input, shape index: {}]
  %s2 = inlined_call_operand.vmem [shape: f32[1,128], index: 2, kind: input, shape index: {}]
  %s3 = inlined_call_operand.hbm [shape: f32[16,128], index: 3, kind: output, shape index: {}]
  %s4 = sld [smem:[#allocation0]]
  $region30: #{tpu_custom_call.1} parent=0
    _
  %s6 = ssub.s32 1, %s4
  %s7 = scalar_select 0, %s6, %s4
  $region1: #{tpu_custom_call.1} parent=0
    #allocation3 [shape = 'u8[8192]{0}', space=vmem, size = 0x2000, scoped, tag = 'input window, operand 0, single buffered']
    #allocation4 [shape = 's32[1]{0}', space=sflag, size = 0x4, scoped, tag = 'scoped memory for tpu_custom_call.1']
    #allocation5 [shape = 's32[1]{0}', space=sflag, size = 0x4, scoped, tag = 'scoped memory for tpu_custom_call.1']
    #allocation6 [shape = 'u8[98304]{0}', space=vmem, size = 0x18000, scoped, tag = 'input window, operand 1, single buffered']
    #allocation7 [shape = 's32[1]{0}', space=sflag, size = 0x4, scoped, tag = 'scoped memory for tpu_custom_call.1']
    #allocation8 [shape = 'u8[8192]{0}', space=vmem, size = 0x2000, scoped, tag = 'output window, operand 0, single buffered']
    %8 = vsyncpa [#allocation4], 0
    %9 = vsyncpa [#allocation7], 0
    %10 = vsyncpa [#allocation5], 0
    // Predicated region
    $region2: #{tpu_custom_call.1} parent=1 // pred_check
      _
    $region3: #{tpu_custom_call.1} parent=1 // pred_check_branch
      %12 = sbr.rel (0) target = $region5
    $region4: #{tpu_custom_call.1} parent=1 // pred_region
      %s14 = ssub.s32 256, 256
      %15 = vsyncadd [#allocation4], %s14
      %s16 = sshll.u32 [#allocation3], 4
      %s17 = int_to_ptr.vmem [resolvable:$true] %s16
      %22 = dma.hbm_to_vmem [thread:$0]  %s0, 256, %s17, [#allocation4], 128, 128, 8
    $region5: #{tpu_custom_call.1} parent=1 // pred_fallthru
      _
    // Predicated region
    $region6: #{tpu_custom_call.1} parent=1 // pred_check
      _
    $region7: #{tpu_custom_call.1} parent=1 // pred_check_branch
      %24 = sbr.rel (0) target = $region9
    $region8: #{tpu_custom_call.1} parent=1 // pred_region
      %s26 = ssub.s32 3072, 3072
      %27 = vsyncadd [#allocation7], %s26
      %s28 = sshll.u32 [#allocation6], 4
      %s29 = int_to_ptr.vmem [resolvable:$true] %s28
      %34 = dma.hbm_to_vmem [thread:$0]  %s1, 3072, %s29, [#allocation7], 64, 64, 4
    $region9: #{tpu_custom_call.1} parent=1 // pred_fallthru
      _
    // Predicated region
    $region10: #{tpu_custom_call.1} parent=1 // pred_check
      _
    $region11: #{tpu_custom_call.1} parent=1 // pred_check_branch
      %36 = sbr.rel (0) target = $region13
    $region12: #{tpu_custom_call.1} parent=1 // pred_region
      _
    $region13: #{tpu_custom_call.1} parent=1 // pred_fallthru
      _
    // Predicated region
    $region14: #{tpu_custom_call.1} parent=1 // pred_check
      _
    $region15: #{tpu_custom_call.1} parent=1 // pred_check_branch
      %38 = sbr.rel (0) target = $region17
    $region16: #{tpu_custom_call.1} parent=1 // pred_region
      %39 = dma.done [#allocation4], 256
    $region17: #{tpu_custom_call.1} parent=1 // pred_fallthru
      _
    // Predicated region
    $region18: #{tpu_custom_call.1} parent=1 // pred_check
      _
    $region19: #{tpu_custom_call.1} parent=1 // pred_check_branch
      %41 = sbr.rel (0) target = $region21
    $region20: #{tpu_custom_call.1} parent=1 // pred_region
      %42 = dma.done [#allocation7], 3072
    $region21: #{tpu_custom_call.1} parent=1 // pred_fallthru
      _
    %v44 = vld [vmem:[#allocation3] sm:$0xff]
    %v45 = vld [vmem:[#allocation3 + $0x8] sm:$0xff]
    %v46 = vtanh.pop %v44
    %v47 = vtanh.pop %v45
    %v48 = vpack.c.bf16 %v47, %v46
    %49 = vst [vmem:[#allocation2] sm:$0xff] %v48
    %v50 = vmul.f32 %v46, 2.0
    %v51 = vmul.f32 %v47, 2.0
    %v52 = vmul.f32 %v50, %v46
    %v53 = vmul.f32 %v51, %v47
    %v54 = vsub.f32 %v52, 1.0
    %v55 = vsub.f32 %v53, 1.0
    %v56 = vpack.c.bf16 %v55, %v54
    %57 = vst [vmem:[#allocation2 + $0x8] sm:$0xff] %v56
    %v58 = vmul.f32 %v50, %v54
    %v59 = vmul.f32 %v51, %v55
    %v60 = vsub.f32 %v58, %v46
    %v61 = vsub.f32 %v59, %v47
    %v62 = vpack.c.bf16 %v61, %v60
    %63 = vst [vmem:[#allocation2 + $0x10] sm:$0xff] %v62
    %v64 = vld [vmem:[#allocation2] sm:$0xff]
    %v65 = vld [vmem:[#allocation2 + $0x8] sm:$0xff]
    %v66 = vld [vmem:[#allocation2 + $0x10] sm:$0xff]
    %v67 = vld [vmem:[#allocation6] sm:$0xf]
    %v68 = vld [vmem:[#allocation6 + $0x4] sm:$0xf]
    %v69 = vld [vmem:[#allocation6 + $0x8] sm:$0xf]
    %v70 = vld [vmem:[#allocation6 + $0xc] sm:$0xf]
    %v71 = vld [vmem:[#allocation6 + $0x10] sm:$0xf]
    %v72 = vld [vmem:[#allocation6 + $0x14] sm:$0xf]
    %v73 = vld [vmem:[#allocation6 + $0x18] sm:$0xf]
    %v74 = vld [vmem:[#allocation6 + $0x1c] sm:$0xf]
    %v75 = vld [vmem:[#allocation6 + $0x20] sm:$0xf]
    %v76 = vld [vmem:[#allocation6 + $0x24] sm:$0xf]
    %v77 = vld [vmem:[#allocation6 + $0x28] sm:$0xf]
    %v78 = vld [vmem:[#allocation6 + $0x2c] sm:$0xf]
    %v79 = vld [vmem:[#allocation6 + $0x30] sm:$0xf]
    %v80 = vld [vmem:[#allocation6 + $0x34] sm:$0xf]
    %v81 = vld [vmem:[#allocation6 + $0x38] sm:$0xf]
    %v82 = vld [vmem:[#allocation6 + $0x3c] sm:$0xf]
    %v83 = vld [vmem:[#allocation6 + $0x40] sm:$0xf]
    %v84 = vld [vmem:[#allocation6 + $0x44] sm:$0xf]
    %v85 = vld [vmem:[#allocation6 + $0x48] sm:$0xf]
    %v86 = vld [vmem:[#allocation6 + $0x4c] sm:$0xf]
    %v87 = vld [vmem:[#allocation6 + $0x50] sm:$0xf]
    %v88 = vld [vmem:[#allocation6 + $0x54] sm:$0xf]
    %v89 = vld [vmem:[#allocation6 + $0x58] sm:$0xf]
    %v90 = vld [vmem:[#allocation6 + $0x5c] sm:$0xf]
    %v91 = vld [vmem:[#allocation6 + $0x60] sm:$0xf]
    %v92 = vld [vmem:[#allocation6 + $0x64] sm:$0xf]
    %v93 = vld [vmem:[#allocation6 + $0x68] sm:$0xf]
    %v94 = vld [vmem:[#allocation6 + $0x6c] sm:$0xf]
    %v95 = vld [vmem:[#allocation6 + $0x70] sm:$0xf]
    %v96 = vld [vmem:[#allocation6 + $0x74] sm:$0xf]
    %v97 = vld [vmem:[#allocation6 + $0x78] sm:$0xf]
    %v98 = vld [vmem:[#allocation6 + $0x7c] sm:$0xf]
    %v99 = vld [vmem:[#allocation6 + $0x80] sm:$0xf]
    %v100 = vld [vmem:[#allocation6 + $0x84] sm:$0xf]
    %v101 = vld [vmem:[#allocation6 + $0x88] sm:$0xf]
    %v102 = vld [vmem:[#allocation6 + $0x8c] sm:$0xf]
    %v103 = vld [vmem:[#allocation6 + $0x90] sm:$0xf]
    %v104 = vld [vmem:[#allocation6 + $0x94] sm:$0xf]
    %v105 = vld [vmem:[#allocation6 + $0x98] sm:$0xf]
    %v106 = vld [vmem:[#allocation6 + $0x9c] sm:$0xf]
    %v107 = vld [vmem:[#allocation6 + $0xa0] sm:$0xf]
    %v108 = vld [vmem:[#allocation6 + $0xa4] sm:$0xf]
    %v109 = vld [vmem:[#allocation6 + $0xa8] sm:$0xf]
    %v110 = vld [vmem:[#allocation6 + $0xac] sm:$0xf]
    %v111 = vld [vmem:[#allocation6 + $0xb0] sm:$0xf]
    %v112 = vld [vmem:[#allocation6 + $0xb4] sm:$0xf]
    %v113 = vld [vmem:[#allocation6 + $0xb8] sm:$0xf]
    %v114 = vld [vmem:[#allocation6 + $0xbc] sm:$0xf]
    %v115 = vld [vmem:[%s2] sm:$0x1]
    %v117 = vlaneseq
    %v118 = vshrl.u32 %v117, 7
    %v119 = vsub.s32 0, %v118
    %v120 = vrot.slane %v115, %v119
    %v170 = vunpack.c.l.b16 %v67
    %v171 = vunpack.c.l.b16 %v68
    %v172 = vunpack.c.l.b16 %v69
    %v173 = vunpack.c.l.b16 %v70
    %v174 = vunpack.c.l.b16 %v71
    %v175 = vunpack.c.l.b16 %v72
    %v176 = vunpack.c.l.b16 %v73
    %v177 = vunpack.c.l.b16 %v74
    %v178 = vunpack.c.l.b16 %v75
    %v179 = vunpack.c.l.b16 %v76
    %v180 = vunpack.c.l.b16 %v77
    %v181 = vunpack.c.l.b16 %v78
    %v182 = vunpack.c.l.b16 %v79
    %v183 = vunpack.c.l.b16 %v80
    %v184 = vunpack.c.l.b16 %v81
    %v185 = vunpack.c.l.b16 %v82
    %v186 = vunpack.c.l.b16 %v83
    %v187 = vunpack.c.l.b16 %v84
    %v188 = vunpack.c.l.b16 %v85
    %v189 = vunpack.c.l.b16 %v86
    %v190 = vunpack.c.l.b16 %v87
    %v191 = vunpack.c.l.b16 %v88
    %v192 = vunpack.c.l.b16 %v89
    %v193 = vunpack.c.l.b16 %v90
    %v194 = vunpack.c.l.b16 %v91
    %v195 = vunpack.c.l.b16 %v92
    %v196 = vunpack.c.l.b16 %v93
    %v197 = vunpack.c.l.b16 %v94
    %v198 = vunpack.c.l.b16 %v95
    %v199 = vunpack.c.l.b16 %v96
    %v200 = vunpack.c.l.b16 %v97
    %v201 = vunpack.c.l.b16 %v98
    %v202 = vunpack.c.l.b16 %v99
    %v203 = vunpack.c.l.b16 %v100
    %v204 = vunpack.c.l.b16 %v101
    %v205 = vunpack.c.l.b16 %v102
    %v206 = vunpack.c.l.b16 %v103
    %v207 = vunpack.c.l.b16 %v104
    %v208 = vunpack.c.l.b16 %v105
    %v209 = vunpack.c.l.b16 %v106
    %v210 = vunpack.c.l.b16 %v107
    %v211 = vunpack.c.l.b16 %v108
    %v212 = vunpack.c.l.b16 %v109
    %v213 = vunpack.c.l.b16 %v110
    %v214 = vunpack.c.l.b16 %v111
    %v215 = vunpack.c.l.b16 %v112
    %v216 = vunpack.c.l.b16 %v113
    %v217 = vunpack.c.l.b16 %v114
    %v218 = vpack.c.b16 %v171, %v170
    %v219 = vpack.c.b16 %v173, %v172
    %v220 = vpack.c.b16 %v175, %v174
    %v221 = vpack.c.b16 %v177, %v176
    %v222 = vpack.c.b16 %v179, %v178
    %v223 = vpack.c.b16 %v181, %v180
    %v224 = vpack.c.b16 %v183, %v182
    %v225 = vpack.c.b16 %v185, %v184
    %v226 = vpack.c.b16 %v187, %v186
    %v227 = vpack.c.b16 %v189, %v188
    %v228 = vpack.c.b16 %v191, %v190
    %v229 = vpack.c.b16 %v193, %v192
    %v230 = vpack.c.b16 %v195, %v194
    %v231 = vpack.c.b16 %v197, %v196
    %v232 = vpack.c.b16 %v199, %v198
    %v233 = vpack.c.b16 %v201, %v200
    %v234 = vpack.c.b16 %v203, %v202
    %v235 = vpack.c.b16 %v205, %v204
    %v236 = vpack.c.b16 %v207, %v206
    %v237 = vpack.c.b16 %v209, %v208
    %v238 = vpack.c.b16 %v211, %v210
    %v239 = vpack.c.b16 %v213, %v212
    %v240 = vpack.c.b16 %v215, %v214
    %v241 = vpack.c.b16 %v217, %v216
    %266 = vmatprep.subr.bf16.mxu0 0
    %267 = vmatpush1.bf16.msra.mxu0 %v218
    %268 = vmatprep.subr.bf16.mxu0 0
    %269 = vmatpush1.bf16.msra.mxu0 %v219
    %270 = vmatprep.subr.bf16.mxu0 0
    %271 = vmatpush1.bf16.msra.mxu0 %v220
    %272 = vmatprep.subr.bf16.mxu0 0
    %273 = vmatpush1.bf16.msra.mxu0 %v221
    %274 = vmatprep.subr.bf16.mxu0 0
    %275 = vmatpush1.bf16.msra.mxu0 %v222
    %276 = vmatprep.subr.bf16.mxu0 0
    %277 = vmatpush1.bf16.msra.mxu0 %v223
    %278 = vmatprep.subr.bf16.mxu0 0
    %279 = vmatpush1.bf16.msra.mxu0 %v224
    %280 = vmatprep.subr.bf16.mxu0 0
    %281 = vmatpush1.bf16.msra.mxu0 %v225
    %282 = vmatprep.subr.bf16.mxu0 0
    %283 = vmatpush1.bf16.msra.mxu0 %v226
    %284 = vmatprep.subr.bf16.mxu0 0
    %285 = vmatpush1.bf16.msra.mxu0 %v227
    %286 = vmatprep.subr.bf16.mxu0 0
    %287 = vmatpush1.bf16.msra.mxu0 %v228
    %288 = vmatprep.subr.bf16.mxu0 0
    %289 = vmatpush1.bf16.msra.mxu0 %v229
    %290 = vmatprep.subr.bf16.mxu0 0
    %291 = vmatpush1.bf16.msra.mxu0 %v230
    %292 = vmatprep.subr.bf16.mxu0 0
    %293 = vmatpush1.bf16.msra.mxu0 %v231
    %294 = vmatprep.subr.bf16.mxu0 0
    %295 = vmatpush1.bf16.msra.mxu0 %v232
    %296 = vmatprep.subr.bf16.mxu0 0
    %297 = vmatpush1.bf16.msra.mxu0 %v233
    %298 = vmatprep.mubr.bf16.mxu0 %v65
    %299 = vmatmul.mubr.bf16.gmra.mrb[0].mxu0 %v64
    %v300 = vpop.f32.mrb[0].mxu0
    %v301 = vadd.f32 %v120, %v300
    %v302 = vpop.f32.mrb[0].mxu0
    %v303 = vpop.f32.mrb[0].mxu0
    %v304 = vadd.f32 %v120, %v303
    %v305 = vpop.f32.mrb[0].mxu0
    %306 = vdwg.mxu0
    %307 = vmatprep.subr.bf16.mxu0 0
    %308 = vmatpush1.bf16.msra.mxu0 %v234
    %309 = vmatprep.subr.bf16.mxu0 0
    %310 = vmatpush1.bf16.msra.mxu0 %v235
    %311 = vmatprep.subr.bf16.mxu0 0
    %312 = vmatpush1.bf16.msra.mxu0 %v236
    %313 = vmatprep.subr.bf16.mxu0 0
    %314 = vmatpush1.bf16.msra.mxu0 %v237
    %315 = vmatprep.subr.bf16.mxu0 0
    %316 = vmatpush1.bf16.msra.mxu0 %v238
    %317 = vmatprep.subr.bf16.mxu0 0
    %318 = vmatpush1.bf16.msra.mxu0 %v239
    %319 = vmatprep.subr.bf16.mxu0 0
    %320 = vmatpush1.bf16.msra.mxu0 %v240
    %321 = vmatprep.subr.bf16.mxu0 0
    %322 = vmatpush1.bf16.msra.mxu0 %v241
    %323 = vmatprep.subr.bf16.mxu0 0
    %324 = vmatpush1.bf16.msra.mxu0 0
    %325 = vmatprep.subr.bf16.mxu0 0
    %326 = vmatpush1.bf16.msra.mxu0 0
    %327 = vmatprep.subr.bf16.mxu0 0
    %328 = vmatpush1.bf16.msra.mxu0 0
    %329 = vmatprep.subr.bf16.mxu0 0
    %330 = vmatpush1.bf16.msra.mxu0 0
    %331 = vmatprep.subr.bf16.mxu0 0
    %332 = vmatpush1.bf16.msra.mxu0 0
    %333 = vmatprep.subr.bf16.mxu0 0
    %334 = vmatpush1.bf16.msra.mxu0 0
    %335 = vmatprep.subr.bf16.mxu0 0
    %336 = vmatpush1.bf16.msra.mxu0 0
    %337 = vmatprep.subr.bf16.mxu0 0
    %338 = vmatpush1.bf16.msra.mxu0 0
    %339 = vmatprep.mubr.bf16.mxu0 0
    %340 = vmatmul.mubr.bf16.gmra.mrb[0].mxu0 %v66
    %v341 = vpop.f32.mrb[0].mxu0
    %v342 = vadd.f32 %v301, %v341
    %v343 = vpop.f32.mrb[0].mxu0
    %v344 = vpop.f32.mrb[0].mxu0
    %v345 = vadd.f32 %v304, %v344
    %v346 = vpop.f32.mrb[0].mxu0
    %347 = vdwg.mxu0
    %348 = vst [vmem:[#allocation8] sm:$0xff] %v342
    %349 = vst [vmem:[#allocation8 + $0x8] sm:$0xff] %v345
    // Predicated region
    $region22: #{tpu_custom_call.1} parent=1 // pred_check
      _
    $region23: #{tpu_custom_call.1} parent=1 // pred_check_branch
      %351 = sbr.rel (0) target = $region25
    $region24: #{tpu_custom_call.1} parent=1 // pred_region
      %s353 = ssub.s32 256, 256
      %354 = vsyncadd [#allocation5], %s353
      %s355 = sshll.u32 [#allocation8], 4
      %s356 = int_to_ptr.vmem [resolvable:$true] %s355
      %361 = dma.vmem_to_hbm [thread:$0]  %s356, 256, %s3, [#allocation5], 128, 128, 8
    $region25: #{tpu_custom_call.1} parent=1 // pred_fallthru
      _
    // Predicated region
    $region26: #{tpu_custom_call.1} parent=1 // pred_check
      _
    $region27: #{tpu_custom_call.1} parent=1 // pred_check_branch
      %363 = sbr.rel (0) target = $region29
    $region28: #{tpu_custom_call.1} parent=1 // pred_region
      %364 = dma.done [#allocation5], 256
    $region29: #{tpu_custom_call.1} parent=1 // pred_fallthru
      _
    %365 = vsyncpa [#allocation4], 1
    %366 = vsyncpa [#allocation7], 1
    %367 = vsyncpa [#allocation5], 1

</llo_original>
